<compile_context>
chip_gen: v5e
topology: v5e:2x2
jax: 0.10.0
libtpu: 0.0.40
codegen_flags: <defaults>
</compile_context>

<pallas_src>
import functools

import jax
import jax.numpy as jnp
from jax.experimental import pallas as pl
from jax.experimental.pallas import tpu as pltpu


def _actor_kernel(x_ref, w_ref, out_ref, *, n_in, n_out, action_bound):
    """One batch tile, batch on the lane axis.

    x_ref  : (n_in, tile_b)           input columns (one column per sample)
    w_ref  : (112 + 2*n_out, W) fused weight slab; row blocks:
               [  0: 64)  fc1 : cols [0:n_in) = W1^T,  col n_in = b1
               [ 64: 96)  fc2 : cols [0:64)   = W2^T,  col 64   = b2
               [ 96:112)  fc3 : cols [0:32)   = W3^T,  col 32   = b3
               [112:112+2*n_out) heads: cols [0:16) = [Wmu;Wstd]^T, col 16 = bias
    out_ref: (2*n_out, tile_b)        rows [0,n_out)=mu, [n_out,2*n_out)=std
    """
    x = x_ref[...]

    # fc1 + relu  -> (64, tile_b)
    w1 = w_ref[0:64, 0:n_in]
    b1 = w_ref[0:64, n_in:n_in + 1]
    h1 = jnp.maximum(
        jnp.dot(w1, x, preferred_element_type=jnp.float32) + b1, 0.0)

    # fc2 + relu  -> (32, tile_b)
    w2 = w_ref[64:96, 0:64]
    b2 = w_ref[64:96, 64:65]
    h2 = jnp.maximum(
        jnp.dot(w2, h1, preferred_element_type=jnp.float32) + b2, 0.0)

    # fc3 + relu  -> (16, tile_b)
    w3 = w_ref[96:112, 0:32]
    b3 = w_ref[96:112, 32:33]
    h3 = jnp.maximum(
        jnp.dot(w3, h2, preferred_element_type=jnp.float32) + b3, 0.0)

    # fused mu|std head: one matmul -> (2*n_out, tile_b)
    wh = w_ref[112:112 + 2 * n_out, 0:16]
    bh = w_ref[112:112 + 2 * n_out, 16:17]
    zh = jnp.dot(wh, h3, preferred_element_type=jnp.float32) + bh

    # static row split: tanh only on mu rows, softplus only on std rows
    out_ref[0:n_out, :] = jnp.tanh(zh[0:n_out, :]) * action_bound
    out_ref[n_out:2 * n_out, :] = jnp.logaddexp(zh[n_out:2 * n_out, :], 0.0)


def pack_params(params):
    """Fuse all weights/biases into one (112 + 2*n_out, width) slab.

    Each layer block is stored transposed (one row per output unit); the
    column right after the layer's fan-in holds the bias, the rest is zero.
    """
    n_in = params["w1"].shape[0]
    n_out = params["wmu"].shape[1]
    width = max(n_in, 64) + 1

    def t_pack(w, b):
        d_in, d_out = w.shape
        blk = jnp.zeros((d_out, width), jnp.float32)
        blk = blk.at[:, :d_in].set(w.T.astype(jnp.float32))
        blk = blk.at[:, d_in:d_in + 1].set(b.T.astype(jnp.float32))
        return blk

    w_head = jnp.concatenate([params["wmu"], params["wstd"]], axis=1)  # (16, 2*n_out)
    b_head = jnp.concatenate([params["bmu"], params["bstd"]], axis=1)  # (1, 2*n_out)

    slab = jnp.concatenate([
        t_pack(params["w1"], params["b1"]),   # rows [  0: 64)
        t_pack(params["w2"], params["b2"]),   # rows [ 64: 96)
        t_pack(params["w3"], params["b3"]),   # rows [ 96:112)
        t_pack(w_head, b_head),               # rows [112:112+2*n_out)
    ], axis=0)
    return {"slab": slab, "n_in": n_in, "n_out": n_out}


def _choose_tile_b(batch):
    """Batch lives on the lane axis: tiles are 128-multiples (or the whole
    batch when small). Aim for >= 2 grid tiles so v7x can shard the
    "parallel" axis across both TensorCores; cap tiles at 2048 lanes so
    per-step working set stays tiny while amortizing per-step overhead."""
    if batch <= 128:
        return batch                      # single tile; block dim == full dim
    half = -(-batch // 2)                 # ceil(batch / 2)
    tile = ((half + 127) // 128) * 128    # round up to lane multiple
    return min(tile, 2048)


def actor_net_forward(x, packed, action_bound):
    """x: (B, n_in) float32. packed: output of pack_params. Returns (mu, std)."""
    B, n_in = x.shape
    assert packed["n_in"] == n_in
    n_out = packed["n_out"]
    slab = packed["slab"]

    # Put batch on the lane axis (lane-dense kernel I/O).
    x_t = x.astype(jnp.float32).T          # (n_in, B)

    tile_b = _choose_tile_b(B)
    n_tiles = pl.cdiv(B, tile_b)

    kernel = functools.partial(
        _actor_kernel, n_in=n_in, n_out=n_out, action_bound=float(action_bound))

    cost = pl.CostEstimate(
        flops=2 * B * (n_in * 64 + 64 * 32 + 32 * 16 + 16 * 2 * n_out),
        transcendentals=2 * B * n_out,
        bytes_accessed=B * (n_in + 2 * n_out) * 4 + int(slab.size) * 4,
    )

    out = pl.pallas_call(
        kernel,
        out_shape=jax.ShapeDtypeStruct((2 * n_out, B), jnp.float32),
        grid=(n_tiles,),
        in_specs=[
            # batch-tiled input, lane-dense
            pl.BlockSpec((n_in, tile_b), lambda i: (0, i)),
            # single fused weight slab, resident across grid steps
            pl.BlockSpec(slab.shape, lambda i: (0, 0)),
        ],
        out_specs=pl.BlockSpec((2 * n_out, tile_b), lambda i: (0, i)),
        compiler_params=pltpu.CompilerParams(
            dimension_semantics=("parallel",)),
        cost_estimate=cost,
    )(x_t, slab)

    mu = out[:n_out, :].T                  # (B, n_out)
    std = out[n_out:, :].T                 # (B, n_out)
    return mu, std


def init_params(key, n_in, n_out):
    """Deterministic synthetic parameters (shapes match Actor_Net.__init__)."""
    dims = [(n_in, 64), (64, 32), (32, 16)]
    names = ["1", "2", "3"]
    params = {}
    keys = jax.random.split(key, 10)
    ki = 0
    for (d_in, d_out), name in zip(dims, names):
        params[f"w{name}"] = (
            jax.random.normal(keys[ki], (d_in, d_out), jnp.float32) * 0.1)
        ki += 1
        params[f"b{name}"] = (
            jax.random.normal(keys[ki], (1, d_out), jnp.float32) * 0.01)
        ki += 1
    for name in ["mu", "std"]:
        params[f"w{name}"] = (
            jax.random.normal(keys[ki], (16, n_out), jnp.float32) * 0.1)
        ki += 1
        params[f"b{name}"] = (
            jax.random.normal(keys[ki], (1, n_out), jnp.float32) * 0.01)
        ki += 1
    return params


def _reference_forward(x, params, action_bound):
    h1 = jnp.maximum(x @ params["w1"] + params["b1"], 0.0)
    h2 = jnp.maximum(h1 @ params["w2"] + params["b2"], 0.0)
    h3 = jnp.maximum(h2 @ params["w3"] + params["b3"], 0.0)
    mu = jnp.tanh(h3 @ params["wmu"] + params["bmu"]) * action_bound
    std = jax.nn.softplus(h3 @ params["wstd"] + params["bstd"])
    return mu, std


if __name__ == "__main__":
    # Pendulum-v1: state dim 3, action dim 1, action bound 2.0
    n_in, n_out = 3, 1
    action_bound = 2.0
    batch = 8

    key = jax.random.PRNGKey(0)
    k_params, k_x = jax.random.split(key)
    params = init_params(k_params, n_in, n_out)
    packed = pack_params(params)
    x = jax.random.normal(k_x, (batch, n_in), jnp.float32)

    mu, std = actor_net_forward(x, packed, action_bound)
    jax.block_until_ready((mu, std))

    # sanity check against pure-JAX reference
    mu_ref, std_ref = _reference_forward(x, params, action_bound)
    assert mu.shape == (batch, n_out) and std.shape == (batch, n_out)
    assert jnp.allclose(mu, mu_ref, atol=1e-5, rtol=1e-5)
    assert jnp.allclose(std, std_ref, atol=1e-5, rtol=1e-5)

    # exercise a non-tile-multiple larger batch (grid > 1, partial last block)
    xb = jax.random.normal(jax.random.PRNGKey(1), (1037, n_in), jnp.float32)
    mu_b, std_b = actor_net_forward(xb, packed, action_bound)
    jax.block_until_ready((mu_b, std_b))
    mu_bref, std_bref = _reference_forward(xb, params, action_bound)
    assert jnp.allclose(mu_b, mu_bref, atol=1e-5, rtol=1e-5)
    assert jnp.allclose(std_b, std_bref, atol=1e-5, rtol=1e-5)

    print("KERNEL_OK")
</pallas_src>

<mosaic_0001>
module attributes {stable_mosaic.version = 11 : i64} {
  func.func @_actor_kernel(%arg0: i32, %arg1: memref<3x8xf32, #tpu.memory_space<vmem>>, %arg2: memref<114x65xf32, #tpu.memory_space<vmem>>, %arg3: memref<2x8xf32, #tpu.memory_space<vmem>>) attributes {dimension_semantics = [#tpu.dimension_semantics<parallel>], iteration_bounds = array<i64: 1>, scalar_prefetch = 0 : i64, scratch_operands = 0 : i64, tpu.core_type = #tpu.core_type<tc>, window_params = [{transform_indices = @transform_0, window_bounds = array<i64: 3, 8>}, {pipeline_mode = #tpu.pipeline_mode<synchronous>, transform_indices = @transform_1, window_bounds = array<i64: 114, 65>}, {transform_indices = @transform_2, window_bounds = array<i64: 2, 8>}]} {
    %c0 = arith.constant 0 : index
    %c0_0 = arith.constant 0 : index
    %0 = vector.load %arg1[%c0, %c0_0] : memref<3x8xf32, #tpu.memory_space<vmem>>, vector<3x8xf32>
    %c0_1 = arith.constant 0 : index
    %c0_2 = arith.constant 0 : index
    %1 = vector.load %arg2[%c0_1, %c0_2] : memref<114x65xf32, #tpu.memory_space<vmem>>, vector<64x3xf32>
    %c0_3 = arith.constant 0 : index
    %c3 = arith.constant 3 : index
    %2 = vector.load %arg2[%c0_3, %c3] : memref<114x65xf32, #tpu.memory_space<vmem>>, vector<64x1xf32>
    %cst = arith.constant dense<0.000000e+00> : vector<64x8xf32>
    %3 = tpu.matmul %1, %0, %cst {dimension_numbers = #tpu.dot_dimension_numbers<[1], [0], [0], [1], [0, 0, 1, 1], [], []>} : vector<64x3xf32>, vector<3x8xf32>, vector<64x8xf32> -> vector<64x8xf32>
    %4 = vector.broadcast %2 : vector<64x1xf32> to vector<64x8xf32>
    %5 = arith.addf %3, %4 : vector<64x8xf32>
    %cst_4 = arith.constant 0.000000e+00 : f32
    %6 = vector.broadcast %cst_4 : f32 to vector<64x8xf32>
    %7 = arith.maximumf %5, %6 : vector<64x8xf32>
    %c64 = arith.constant 64 : index
    %c0_5 = arith.constant 0 : index
    %8 = vector.load %arg2[%c64, %c0_5] : memref<114x65xf32, #tpu.memory_space<vmem>>, vector<32x64xf32>
    %c64_6 = arith.constant 64 : index
    %c64_7 = arith.constant 64 : index
    %9 = vector.load %arg2[%c64_6, %c64_7] : memref<114x65xf32, #tpu.memory_space<vmem>>, vector<32x1xf32>
    %cst_8 = arith.constant dense<0.000000e+00> : vector<32x8xf32>
    %10 = tpu.matmul %8, %7, %cst_8 {dimension_numbers = #tpu.dot_dimension_numbers<[1], [0], [0], [1], [0, 0, 1, 1], [], []>} : vector<32x64xf32>, vector<64x8xf32>, vector<32x8xf32> -> vector<32x8xf32>
    %11 = vector.broadcast %9 : vector<32x1xf32> to vector<32x8xf32>
    %12 = arith.addf %10, %11 : vector<32x8xf32>
    %cst_9 = arith.constant 0.000000e+00 : f32
    %13 = vector.broadcast %cst_9 : f32 to vector<32x8xf32>
    %14 = arith.maximumf %12, %13 : vector<32x8xf32>
    %c96 = arith.constant 96 : index
    %c0_10 = arith.constant 0 : index
    %15 = vector.load %arg2[%c96, %c0_10] : memref<114x65xf32, #tpu.memory_space<vmem>>, vector<16x32xf32>
    %c96_11 = arith.constant 96 : index
    %c32 = arith.constant 32 : index
    %16 = vector.load %arg2[%c96_11, %c32] : memref<114x65xf32, #tpu.memory_space<vmem>>, vector<16x1xf32>
    %cst_12 = arith.constant dense<0.000000e+00> : vector<16x8xf32>
    %17 = tpu.matmul %15, %14, %cst_12 {dimension_numbers = #tpu.dot_dimension_numbers<[1], [0], [0], [1], [0, 0, 1, 1], [], []>} : vector<16x32xf32>, vector<32x8xf32>, vector<16x8xf32> -> vector<16x8xf32>
    %18 = vector.broadcast %16 : vector<16x1xf32> to vector<16x8xf32>
    %19 = arith.addf %17, %18 : vector<16x8xf32>
    %cst_13 = arith.constant 0.000000e+00 : f32
    %20 = vector.broadcast %cst_13 : f32 to vector<16x8xf32>
    %21 = arith.maximumf %19, %20 : vector<16x8xf32>
    %c112 = arith.constant 112 : index
    %c0_14 = arith.constant 0 : index
    %22 = vector.load %arg2[%c112, %c0_14] : memref<114x65xf32, #tpu.memory_space<vmem>>, vector<2x16xf32>
    %c112_15 = arith.constant 112 : index
    %c16 = arith.constant 16 : index
    %23 = vector.load %arg2[%c112_15, %c16] : memref<114x65xf32, #tpu.memory_space<vmem>>, vector<2x1xf32>
    %cst_16 = arith.constant dense<0.000000e+00> : vector<2x8xf32>
    %24 = tpu.matmul %22, %21, %cst_16 {dimension_numbers = #tpu.dot_dimension_numbers<[1], [0], [0], [1], [0, 0, 1, 1], [], []>} : vector<2x16xf32>, vector<16x8xf32>, vector<2x8xf32> -> vector<2x8xf32>
    %25 = vector.broadcast %23 : vector<2x1xf32> to vector<2x8xf32>
    %26 = arith.addf %24, %25 : vector<2x8xf32>
    %27 = vector.extract_strided_slice %26 {offsets = [0, 0], sizes = [1, 8], strides = [1, 1]} : vector<2x8xf32> to vector<1x8xf32>
    %28 = math.tanh %27 : vector<1x8xf32>
    %cst_17 = arith.constant 2.000000e+00 : f32
    %29 = vector.broadcast %cst_17 : f32 to vector<1x8xf32>
    %30 = arith.mulf %28, %29 : vector<1x8xf32>
    %c0_18 = arith.constant 0 : index
    %c0_19 = arith.constant 0 : index
    %31 = vector.load %arg3[%c0_18, %c0_19] : memref<2x8xf32, #tpu.memory_space<vmem>>, vector<1x8xf32>
    tpu.vector_store %arg3[%c0_18, %c0_19], %30 {strides = array<i32>} : memref<2x8xf32, #tpu.memory_space<vmem>>, vector<1x8xf32>,
    %32 = vector.extract_strided_slice %26 {offsets = [1, 0], sizes = [1, 8], strides = [1, 1]} : vector<2x8xf32> to vector<1x8xf32>
    %cst_20 = arith.constant 0.000000e+00 : f32
    %33 = vector.broadcast %cst_20 : f32 to vector<1x8xf32>
    %34 = arith.maximumf %32, %33 : vector<1x8xf32>
    %35 = vector.broadcast %cst_20 : f32 to vector<1x8xf32>
    %36 = arith.subf %32, %35 : vector<1x8xf32>
    %37 = arith.cmpf one, %36, %36 : vector<1x8xf32>
    %38 = vector.broadcast %cst_20 : f32 to vector<1x8xf32>
    %39 = arith.addf %32, %38 : vector<1x8xf32>
    %40 = math.absf %36 : vector<1x8xf32>
    %cst_21 = arith.constant 0.000000e+00 : f32
    %41 = vector.broadcast %cst_21 : f32 to vector<1x8xf32>
    %42 = arith.subf %41, %40 : vector<1x8xf32>
    %43 = math.exp %42 : vector<1x8xf32>
    %44 = math.log1p %43 : vector<1x8xf32>
    %45 = arith.addf %34, %44 : vector<1x8xf32>
    %46 = arith.select %37, %39, %45 : vector<1x8xi1>, vector<1x8xf32>
    %c1 = arith.constant 1 : index
    %c0_22 = arith.constant 0 : index
    %47 = vector.load %arg3[%c1, %c0_22] : memref<2x8xf32, #tpu.memory_space<vmem>>, vector<1x8xf32>
    tpu.vector_store %arg3[%c1, %c0_22], %46 {strides = array<i32>} : memref<2x8xf32, #tpu.memory_space<vmem>>, vector<1x8xf32>,
    return
  }
  func.func @transform_0(%arg0: i32) -> (i32, i32) {
    %c0_i32 = arith.constant 0 : i32
    %c0_i32_0 = arith.constant 0 : i32
    return %c0_i32, %arg0 : i32, i32
  }
  func.func @transform_1(%arg0: i32) -> (i32, i32) {
    %c0_i32 = arith.constant 0 : i32
    %c0_i32_0 = arith.constant 0 : i32
    %c0_i32_1 = arith.constant 0 : i32
    return %c0_i32, %c0_i32_0 : i32, i32
  }
  func.func @transform_2(%arg0: i32) -> (i32, i32) {
    %c0_i32 = arith.constant 0 : i32
    %c0_i32_0 = arith.constant 0 : i32
    return %c0_i32, %arg0 : i32, i32
  }
}

</mosaic_0001>

<llo_original>
// kernel: tpu_custom_call.1
$region0: #{tpu_custom_call.1}
  #allocation0 [shape = 'u32[]', space=smem, size = 0x4, offset = 0x4, fixed_abs, tag = 'smem constant byte address 0x4 - core index']
  #allocation1 [shape = 'u32[72,128]{1,0:T(1,128)}', space=vmem, size = 0x9000, scoped, tag = 'internal scratch']
  %s0 = inlined_call_operand.vmem [shape: f32[3,8], index: 0, kind: input, shape index: {}]
  %s1 = inlined_call_operand.vmem [shape: f32[114,65], index: 1, kind: input, shape index: {}]
  %s2 = inlined_call_operand.hbm [shape: f32[2,8], index: 2, kind: output, shape index: {}]
  %s3 = sld [smem:[#allocation0]]
  $region18: #{tpu_custom_call.1} parent=0
    _
  %s5 = ssub.s32 1, %s3
  %s6 = scalar_select 0, %s5, %s3
  $region1: #{tpu_custom_call.1} parent=0
    #allocation2 [shape = 'u8[1024]{0}', space=vmem, size = 0x400, scoped, tag = 'output window, operand 0, single buffered']
    #allocation3 [shape = 's32[1]{0}', space=sflag, size = 0x4, scoped, tag = 'scoped memory for tpu_custom_call.1']
    %7 = vsyncpa [#allocation3], 0
    // Predicated region
    $region2: #{tpu_custom_call.1} parent=1 // pred_check
      _
    $region3: #{tpu_custom_call.1} parent=1 // pred_check_branch
      %9 = sbr.rel (0) target = $region5
    $region4: #{tpu_custom_call.1} parent=1 // pred_region
      _
    $region5: #{tpu_custom_call.1} parent=1 // pred_fallthru
      _
    // Predicated region
    $region6: #{tpu_custom_call.1} parent=1 // pred_check
      _
    $region7: #{tpu_custom_call.1} parent=1 // pred_check_branch
      %11 = sbr.rel (0) target = $region9
    $region8: #{tpu_custom_call.1} parent=1 // pred_region
      _
    $region9: #{tpu_custom_call.1} parent=1 // pred_fallthru
      _
    %v12 = vld [vmem:[%s0] sm:$0x7]
    %v13 = vld [vmem:[%s1] sm:$0xff]
    %v14 = vld [vmem:[%s1 + $0x8] sm:$0xff]
    %v15 = vld [vmem:[%s1 + $0x10] sm:$0xff]
    %v16 = vld [vmem:[%s1 + $0x18] sm:$0xff]
    %v17 = vld [vmem:[%s1 + $0x20] sm:$0xff]
    %v18 = vld [vmem:[%s1 + $0x28] sm:$0xff]
    %v19 = vld [vmem:[%s1 + $0x30] sm:$0xff]
    %v20 = vld [vmem:[%s1 + $0x38] sm:$0xff]
    %22 = vset.pattern.permute.xlu0 3
    %23 = vperm.xlu0 %22, %v13
    %v24 = vpop.permute.xlu0 %23
    %27 = vset.pattern.permute.xlu0 3
    %28 = vperm.xlu0 %27, %v14
    %v29 = vpop.permute.xlu0 %28
    %32 = vset.pattern.permute.xlu0 3
    %33 = vperm.xlu0 %32, %v15
    %v34 = vpop.permute.xlu0 %33
    %37 = vset.pattern.permute.xlu0 3
    %38 = vperm.xlu0 %37, %v16
    %v39 = vpop.permute.xlu0 %38
    %42 = vset.pattern.permute.xlu0 3
    %43 = vperm.xlu0 %42, %v17
    %v44 = vpop.permute.xlu0 %43
    %47 = vset.pattern.permute.xlu0 3
    %48 = vperm.xlu0 %47, %v18
    %v49 = vpop.permute.xlu0 %48
    %52 = vset.pattern.permute.xlu0 3
    %53 = vperm.xlu0 %52, %v19
    %v54 = vpop.permute.xlu0 %53
    %57 = vset.pattern.permute.xlu0 3
    %58 = vperm.xlu0 %57, %v20
    %v59 = vpop.permute.xlu0 %58
    %vm61 = vcmask 23552
    %v62 = vsel %vm61, %v13, 0
    %v64 = vsel %vm61, %v14, 0
    %v66 = vsel %vm61, %v15, 0
    %v68 = vsel %vm61, %v16, 0
    %v70 = vsel %vm61, %v17, 0
    %v72 = vsel %vm61, %v18, 0
    %v74 = vsel %vm61, %v19, 0
    %v76 = vsel %vm61, %v20, 0
    %vm78 = vcmask 1042432
    %v80 = vsel %vm78, %v12, 0
    %82 = vmatpush.msra.mxu0 0.0
    %83 = vmatpush.msra.mxu0 0.0
    %84 = vmatpush.msra.mxu0 0.0
    %85 = vmatpush.msra.mxu0 0.0
    %86 = vmatpush.msra.mxu0 0.0
    %87 = vmatpush.msra.mxu0 0.0
    %88 = vmatpush.msra.mxu0 0.0
    %89 = vmatpush.msra.mxu0 0.0
    %90 = vmatpush.msra.mxu0 0.0
    %91 = vmatpush.msra.mxu0 0.0
    %92 = vmatpush.msra.mxu0 0.0
    %93 = vmatpush.msra.mxu0 0.0
    %94 = vmatpush.msra.mxu0 0.0
    %95 = vmatpush.msra.mxu0 0.0
    %96 = vmatpush.msra.mxu0 0.0
    %97 = vmatpush.msra.mxu0 %v80
    %98 = vmatmul.f32.gmra.mxu0 %v62
    %v99 = vpop.f32.mrf.mxu0
    %v100 = vadd.f32 %v24, %v99
    %101 = vmatmul.f32.gmra.mxu0 %v64
    %v102 = vpop.f32.mrf.mxu0
    %v103 = vadd.f32 %v29, %v102
    %104 = vmatmul.f32.gmra.mxu0 %v66
    %v105 = vpop.f32.mrf.mxu0
    %v106 = vadd.f32 %v34, %v105
    %107 = vmatmul.f32.gmra.mxu0 %v68
    %v108 = vpop.f32.mrf.mxu0
    %v109 = vadd.f32 %v39, %v108
    %110 = vmatmul.f32.gmra.mxu0 %v70
    %v111 = vpop.f32.mrf.mxu0
    %v112 = vadd.f32 %v44, %v111
    %113 = vmatmul.f32.gmra.mxu0 %v72
    %v114 = vpop.f32.mrf.mxu0
    %v115 = vadd.f32 %v49, %v114
    %116 = vmatmul.f32.gmra.mxu0 %v74
    %v117 = vpop.f32.mrf.mxu0
    %v118 = vadd.f32 %v54, %v117
    %119 = vmatmul.f32.gmra.mxu0 %v76
    %v120 = vpop.f32.mrf.mxu0
    %v121 = vadd.f32 %v59, %v120
    %122 = vdwg.mxu0
    %v123 = vmax.f32 %v100, 0.0
    %v124 = vmax.f32 %v103, 0.0
    %v125 = vmax.f32 %v106, 0.0
    %v126 = vmax.f32 %v109, 0.0
    %v127 = vmax.f32 %v112, 0.0
    %v128 = vmax.f32 %v115, 0.0
    %v129 = vmax.f32 %v118, 0.0
    %v130 = vmax.f32 %v121, 0.0
    %v131 = vld [vmem:[%s1 + $0x40] sm:$0xff]
    %v132 = vld [vmem:[%s1 + $0x48] sm:$0xff]
    %v133 = vld [vmem:[%s1 + $0x50] sm:$0xff]
    %v134 = vld [vmem:[%s1 + $0x58] sm:$0xff]
    %136 = vset.pattern.permute.xlu0 64
    %137 = vperm.xlu0 %136, %v131
    %v138 = vpop.permute.xlu0 %137
    %141 = vset.pattern.permute.xlu0 64
    %142 = vperm.xlu0 %141, %v132
    %v143 = vpop.permute.xlu0 %142
    %146 = vset.pattern.permute.xlu0 64
    %147 = vperm.xlu0 %146, %v133
    %v148 = vpop.permute.xlu0 %147
    %151 = vset.pattern.permute.xlu0 64
    %152 = vperm.xlu0 %151, %v134
    %v153 = vpop.permute.xlu0 %152
    %vm155 = vcmask 523264
    %v156 = vsel %vm155, %v131, 0
    %v158 = vsel %vm155, %v132, 0
    %v160 = vsel %vm155, %v133, 0
    %v162 = vsel %vm155, %v134, 0
    %164 = vmatpush.msra.mxu0 0.0
    %165 = vmatpush.msra.mxu0 0.0
    %166 = vmatpush.msra.mxu0 0.0
    %167 = vmatpush.msra.mxu0 0.0
    %168 = vmatpush.msra.mxu0 0.0
    %169 = vmatpush.msra.mxu0 0.0
    %170 = vmatpush.msra.mxu0 0.0
    %171 = vmatpush.msra.mxu0 0.0
    %172 = vmatpush.msra.mxu0 %v130
    %173 = vmatpush.msra.mxu0 %v129
    %174 = vmatpush.msra.mxu0 %v128
    %175 = vmatpush.msra.mxu0 %v127
    %176 = vmatpush.msra.mxu0 %v126
    %177 = vmatpush.msra.mxu0 %v125
    %178 = vmatpush.msra.mxu0 %v124
    %179 = vmatpush.msra.mxu0 %v123
    %180 = vmatmul.f32.gmra.mxu0 %v156
    %v181 = vpop.f32.mrf.mxu0
    %v182 = vadd.f32 %v138, %v181
    %183 = vmatmul.f32.gmra.mxu0 %v158
    %v184 = vpop.f32.mrf.mxu0
    %v185 = vadd.f32 %v143, %v184
    %186 = vmatmul.f32.gmra.mxu0 %v160
    %v187 = vpop.f32.mrf.mxu0
    %v188 = vadd.f32 %v148, %v187
    %189 = vmatmul.f32.gmra.mxu0 %v162
    %v190 = vpop.f32.mrf.mxu0
    %v191 = vadd.f32 %v153, %v190
    %192 = vdwg.mxu0
    %v193 = vmax.f32 %v182, 0.0
    %v194 = vmax.f32 %v185, 0.0
    %v195 = vmax.f32 %v188, 0.0
    %v196 = vmax.f32 %v191, 0.0
    %v197 = vld [vmem:[%s1 + $0x60] sm:$0xff]
    %v198 = vld [vmem:[%s1 + $0x68] sm:$0xff]
    %200 = vset.pattern.permute.xlu0 32
    %201 = vperm.xlu0 %200, %v197
    %v202 = vpop.permute.xlu0 %201
    %205 = vset.pattern.permute.xlu0 32
    %206 = vperm.xlu0 %205, %v198
    %v207 = vpop.permute.xlu0 %206
    %vm209 = vcmask 261120
    %v210 = vsel %vm209, %v197, 0
    %v212 = vsel %vm209, %v198, 0
    %214 = vmatpush.msra.mxu0 0.0
    %215 = vmatpush.msra.mxu0 0.0
    %216 = vmatpush.msra.mxu0 0.0
    %217 = vmatpush.msra.mxu0 0.0
    %218 = vmatpush.msra.mxu0 0.0
    %219 = vmatpush.msra.mxu0 0.0
    %220 = vmatpush.msra.mxu0 0.0
    %221 = vmatpush.msra.mxu0 0.0
    %222 = vmatpush.msra.mxu0 0.0
    %223 = vmatpush.msra.mxu0 0.0
    %224 = vmatpush.msra.mxu0 0.0
    %225 = vmatpush.msra.mxu0 0.0
    %226 = vmatpush.msra.mxu0 %v196
    %227 = vmatpush.msra.mxu0 %v195
    %228 = vmatpush.msra.mxu0 %v194
    %229 = vmatpush.msra.mxu0 %v193
    %230 = vmatmul.f32.gmra.mxu0 %v210
    %v231 = vpop.f32.mrf.mxu0
    %v232 = vadd.f32 %v202, %v231
    %233 = vmatmul.f32.gmra.mxu0 %v212
    %v234 = vpop.f32.mrf.mxu0
    %v235 = vadd.f32 %v207, %v234
    %236 = vdwg.mxu0
    %v237 = vmax.f32 %v232, 0.0
    %v238 = vmax.f32 %v235, 0.0
    %v239 = vld [vmem:[%s1 + $0x70] sm:$0x3]
    %241 = vset.pattern.permute.xlu0 16
    %242 = vperm.xlu0 %241, %v239
    %v243 = vpop.permute.xlu0 %242
    %vm245 = vcmask 130048
    %v246 = vsel %vm245, %v239, 0
    %248 = vmatpush.msra.mxu0 0.0
    %249 = vmatpush.msra.mxu0 0.0
    %250 = vmatpush.msra.mxu0 0.0
    %251 = vmatpush.msra.mxu0 0.0
    %252 = vmatpush.msra.mxu0 0.0
    %253 = vmatpush.msra.mxu0 0.0
    %254 = vmatpush.msra.mxu0 0.0
    %255 = vmatpush.msra.mxu0 0.0
    %256 = vmatpush.msra.mxu0 0.0
    %257 = vmatpush.msra.mxu0 0.0
    %258 = vmatpush.msra.mxu0 0.0
    %259 = vmatpush.msra.mxu0 0.0
    %260 = vmatpush.msra.mxu0 0.0
    %261 = vmatpush.msra.mxu0 0.0
    %262 = vmatpush.msra.mxu0 %v238
    %263 = vmatpush.msra.mxu0 %v237
    %264 = vmatmul.f32.gmra.mxu0 %v246
    %v265 = vpop.f32.mrf.mxu0
    %v266 = vadd.f32 %v243, %v265
    %267 = vdwg.mxu0
    %v268 = vtanh.pop %v266
    %v269 = vmul.f32 %v268, 2.0
    %vm270 = vcmask 57344
    %271 = vst.msk [vmem:[#allocation2] sm:$0x1] %vm270, %v269
    %v272 = vmax.f32 %v266, 0.0
    %vm273 = vcmp.ne.f32.partialorder %v266, %v266
    %v274 = vadd.f32 %v266, 0.0
    %v275 = vand.u32 2147483647, %v266
    %v276 = vsub.f32 0.0, %v275
    %v277 = vmul.f32 %v276, 1.442695
    %v278 = vpow.pop %v277
    %v279 = vadd.f32 %v278, 1.0
    %v280 = vlog2.pop %v279
    %v281 = vmul.f32 %v280, 0.6931472
    %v282 = vmul.f32 -0.5, %v278
    %v283 = vadd.f32 %v282, 1.0
    %v284 = vmul.f32 %v283, %v278
    %v285 = vand.u32 2147483647, %v278
    %vm286 = vcmp.lt.f32.partialorder %v285, 0.0004427343
    %v287 = vsel %vm286, %v284, %v281
    %v288 = vadd.f32 %v272, %v287
    %v289 = vsel %vm273, %v274, %v288
    %vm290 = vcmask 58369
    %291 = vst.msk [vmem:[#allocation2] sm:$0x2] %vm290, %v289
    // Predicated region
    $region10: #{tpu_custom_call.1} parent=1 // pred_check
      _
    $region11: #{tpu_custom_call.1} parent=1 // pred_check_branch
      %293 = sbr.rel (0) target = $region13
    $region12: #{tpu_custom_call.1} parent=1 // pred_region
      %295 = vsyncadd [#allocation3], 0
      %s297 = sshll.u32 [#allocation2], 4
      %s298 = int_to_ptr.vmem [resolvable:$true] %s297
      %s299 = sshll.u32 %s2, 4
      %s300 = int_to_ptr.hbm [resolvable:$true] %s299
      %302 = dma.vmem_to_hbm [thread:$0]  %s298, 32, %s300, [#allocation3]
    $region13: #{tpu_custom_call.1} parent=1 // pred_fallthru
      _
    // Predicated region
    $region14: #{tpu_custom_call.1} parent=1 // pred_check
      _
    $region15: #{tpu_custom_call.1} parent=1 // pred_check_branch
      %304 = sbr.rel (0) target = $region17
    $region16: #{tpu_custom_call.1} parent=1 // pred_region
      %306 = dma.done [#allocation3], 32
    $region17: #{tpu_custom_call.1} parent=1 // pred_fallthru
      _
    %307 = vsyncpa [#allocation3], 1

</llo_original>
